<compile_context>
chip_gen: v7x
topology: tpu7x:2x2x1
jax: 0.10.0
libtpu: 0.0.40
codegen_flags: <defaults>
</compile_context>

<pallas_src>
import functools

import jax
import jax.numpy as jnp
from jax.experimental import pallas as pl
from jax.experimental.pallas import tpu as pltpu


def _round_up(x, mult):
    return ((x + mult - 1) // mult) * mult


def _pick_tc(C, cap):
    """Prefer a 128-multiple <= cap that divides C (no ragged tail); else fall back to cap."""
    t = (cap // 128) * 128
    while t >= 128:
        if C % t == 0:
            return t
        t -= 128
    return cap  # ragged final tile; Pallas masks the out-of-bounds lanes


def _select_tiles(B, C, D, compute_dtype, out_dtype, tb, tc, budget_bytes):
    """Pick (tb, tc) under an explicit double-buffered VMEM budget."""
    cbytes = jnp.dtype(compute_dtype).itemsize
    obytes = jnp.dtype(out_dtype).itemsize
    if tb is None:
        tb = min(512, _round_up(B, 8))            # raised cap (review): tb sets AI on weight
    if tc is None:
        tc = C if C <= 2048 else _pick_tc(C, 2048)  # lane-dense, up to 2048 wide

    def need(tb_, tc_):
        # 2x for BlockSpec double-buffering: weight + embeddings + output + labels tiles
        return 2 * (D * tc_ * cbytes + tb_ * D * cbytes + tb_ * tc_ * obytes + tb_ * 4)

    while need(tb, tc) > budget_bytes:
        if tc > 128 and tc % 256 == 0:
            tc //= 2                               # stays a 128-multiple
        else:
            new_tb = max(8, _round_up(tb // 2, 8))
            if new_tb == tb:
                # TODO(synk): for very large D, add an innermost K-tiling grid axis
                # ("arbitrary") with an f32 VMEM accumulator under pl.when instead of
                # relying on an un-tiled D fitting VMEM (matters most on v7x / v5e).
                break
            tb = new_tb
    return tb, tc, need(tb, tc)


def _fold_weight(weight, *, s, eps, compute_dtype):
    """Column-normalize and scale by s, folded into the compute-dtype cast (wrapper-side)."""
    w32 = weight.astype(jnp.float32)
    inv = 1.0 / jnp.sqrt(jnp.sum(w32 * w32, axis=0, keepdims=True) + eps)  # (1, C)
    return (w32 * (inv * s)).astype(compute_dtype)
    # TODO(synk): optional int8 (v5e/v6e) or fp8 (v7x) weight quantization with the
    # per-column scale absorbed here would halve the weight HBM stream again.


def _am_softmax_kernel(emb_ref, w_ref, lab_ref, out_ref, *, s, sm, tc):
    """One (tb, tc) output tile: out = clip(emb @ w_scaled, -s, s) - s*m * one_hot(label).

    emb_ref: (tb, D)  compute dtype  -- inner-axis stream (small)
    w_ref:   (D, tc)  compute dtype  -- already column-normalized and scaled by s;
                                        indexed by the OUTER grid axis only, so it stays
                                        resident in VMEM for the whole batch sweep
    lab_ref: (tb, 1)  int32
    out_ref: (tb, tc) out dtype
    """
    j = pl.program_id(0)  # C-tile index (outer grid axis)

    # MXU matmul, f32 accumulation. Column norm and s are pre-folded into w_ref.
    logits = jnp.dot(emb_ref[...], w_ref[...], preferred_element_type=jnp.float32)
    logits = jnp.clip(logits, -s, s)                     # == clip(cos, -1, 1) * s

    # Additive-margin epilogue: subtract s*m at the label column only.
    local_label = lab_ref[...] - j * tc                  # (tb, 1) scalar-row shift
    col_ids = jax.lax.broadcasted_iota(jnp.int32, logits.shape, dimension=1)
    out_ref[...] = (logits - jnp.where(col_ids == local_label, sm, 0.0)
                    ).astype(out_ref.dtype)


def am_softmax_forward(embeddings, weight, labels, *, m=0.35, s=30.0, eps=0.0,
                       compute_dtype=jnp.bfloat16, out_dtype=jnp.float32,
                       tb=None, tc=None, vmem_budget_bytes=24 * 1024 * 1024):
    """embeddings: (B, D), weight: (D, C), labels: (B,) int -> (B, C) logits."""
    B, D = embeddings.shape
    D2, C = weight.shape
    assert D == D2, "embeddings and weight disagree on in_features"

    # Hoisted + folded column normalization / scale (single fused multiply+cast).
    w_k = _fold_weight(weight, s=s, eps=eps, compute_dtype=compute_dtype)

    # Tile selection with explicit VMEM accounting (never pads the weight).
    tb, tc, need_bytes = _select_tiles(B, C, D, compute_dtype, out_dtype, tb, tc,
                                       vmem_budget_bytes)

    # Pad only the (small) batch side to a multiple of tb.
    Bp = _round_up(B, tb)
    emb = embeddings.astype(compute_dtype)
    labels_i32 = labels.astype(jnp.int32)
    if Bp != B:
        emb = jnp.pad(emb, ((0, Bp - B), (0, 0)))
        labels_i32 = jnp.pad(labels_i32, (0, Bp - B))
    labels_2d = labels_i32.reshape(Bp, 1)

    # C tiles OUTER (weight resident across the inner batch sweep; megacore splits C),
    # B tiles INNER.
    grid = (pl.cdiv(C, tc), Bp // tb)

    kernel = functools.partial(_am_softmax_kernel,
                               s=float(s), sm=float(s) * float(m), tc=tc)
    vmem_limit = int(min(max(need_bytes + (4 << 20), 32 << 20), 64 << 20))

    out = pl.pallas_call(
        kernel,
        out_shape=jax.ShapeDtypeStruct((Bp, C), out_dtype),
        grid_spec=pltpu.PrefetchScalarGridSpec(
            num_scalar_prefetch=0,
            grid=grid,
            in_specs=[
                pl.BlockSpec((tb, D), lambda j, i: (i, 0)),   # embeddings (inner stream)
                pl.BlockSpec((D, tc), lambda j, i: (0, j)),   # weight: outer axis only
                pl.BlockSpec((tb, 1), lambda j, i: (i, 0)),   # labels
            ],
            out_specs=pl.BlockSpec((tb, tc), lambda j, i: (i, j)),
        ),
        compiler_params=pltpu.CompilerParams(
            dimension_semantics=("parallel", "parallel"),
            vmem_limit_bytes=vmem_limit),
    )(emb, w_k, labels_2d)

    # TODO(synk): fusing the downstream log-softmax / cross-entropy row reduction into
    # this kernel (C as a reduction axis with carried row max/sum) would remove the
    # (B, C) writeback entirely; out of scope here.
    return out[:B]


# ----------------------------- pure-JAX references -----------------------------

def am_softmax_reference_f32(embeddings, weight, labels, *, m=0.35, s=30.0):
    """f32 reference matching the PyTorch forward (device_id=None path)."""
    w_norm = weight / jnp.linalg.norm(weight, axis=0, keepdims=True)
    cos = jnp.clip(jnp.dot(embeddings, w_norm, precision=jax.lax.Precision.HIGHEST),
                   -1.0, 1.0)
    phi = cos - m
    one_hot = jax.nn.one_hot(labels, cos.shape[1], dtype=jnp.bool_)
    return jnp.where(one_hot, phi, cos) * s


def am_softmax_reference_matched(embeddings, weight, labels, *, m=0.35, s=30.0,
                                 eps=0.0, compute_dtype=jnp.bfloat16):
    """Reference using the exact same folded-weight / clip(-s, s) formulation as the kernel."""
    w_k = _fold_weight(weight, s=s, eps=eps, compute_dtype=compute_dtype)
    logits = jnp.dot(embeddings.astype(compute_dtype), w_k,
                     preferred_element_type=jnp.float32)
    logits = jnp.clip(logits, -s, s)
    one_hot = jax.nn.one_hot(labels, logits.shape[1], dtype=jnp.float32)
    return logits - (s * m) * one_hot


if __name__ == "__main__":
    key = jax.random.PRNGKey(0)
    B, D, C = 8, 32, 128  # batch, in_features, out_features
    k_emb, k_w, k_lab, k_emb2 = jax.random.split(key, 4)
    labels = jax.random.randint(k_lab, (B,), 0, C, dtype=jnp.int32)

    # ---- Check 1: precision-independent exactness check -------------------------
    # Inputs chosen so every product / partial sum is exact in BOTH the bf16 and f32
    # MXU paths: weight columns have exactly four +/-0.5 entries (unit L2 norm) and
    # embeddings lie on a 0.5 grid, so the kernel must match the ideal reference.
    r = jnp.arange(D)[:, None]
    c = jnp.arange(C)[None, :]
    sign = jnp.where(((r + c) % 2) == 0, 1.0, -1.0)
    w_exact = jnp.where((r // 4) == (c % (D // 4)), 0.5 * sign, 0.0).astype(jnp.float32)
    emb_exact = (jnp.round(jax.random.uniform(k_emb2, (B, D), minval=-4.0, maxval=4.0))
                 * 0.5).astype(jnp.float32)

    ref_exact = am_softmax_reference_f32(emb_exact, w_exact, labels)
    out_exact_f32 = jax.block_until_ready(
        am_softmax_forward(emb_exact, w_exact, labels, compute_dtype=jnp.float32))
    out_exact_bf16 = jax.block_until_ready(
        am_softmax_forward(emb_exact, w_exact, labels, compute_dtype=jnp.bfloat16))
    assert out_exact_f32.shape == (B, C)
    assert jnp.allclose(out_exact_f32, ref_exact, atol=1e-4, rtol=0.0)
    assert jnp.allclose(out_exact_bf16, ref_exact, atol=1e-4, rtol=0.0)

    # ---- Check 2: random inputs, default (bf16 MXU operands) fast path ----------
    embeddings = jax.random.normal(k_emb, (B, D), dtype=jnp.float32)
    # Deterministic init mimicking kernel.data.uniform_(-1,1).renorm_(2,1,1e-5).mul_(1e5)
    w_raw = jax.random.uniform(k_w, (D, C), minval=-1.0, maxval=1.0, dtype=jnp.float32)
    weight = w_raw / jnp.linalg.norm(w_raw, axis=0, keepdims=True)

    out_bf16 = jax.block_until_ready(am_softmax_forward(embeddings, weight, labels))
    ref_matched = am_softmax_reference_matched(embeddings, weight, labels)
    ref_ideal = am_softmax_reference_f32(embeddings, weight, labels)
    assert out_bf16.shape == (B, C)
    assert jnp.allclose(out_bf16, ref_matched, atol=2e-2, rtol=1e-2)
    # loose sanity vs ideal f32 math (bf16 operand rounding amplified by s=30)
    assert jnp.allclose(out_bf16, ref_ideal, atol=1.0, rtol=0.0)

    # TODO(synk): the PyTorch device_id multi-GPU model-parallel path (chunked kernel
    # across devices) is out of scope for a single-TPU kernel; the math is identical.
    print("KERNEL_OK")
</pallas_src>

<mosaic_0001>
module attributes {stable_mosaic.version = 11 : i64} {
  func.func @_am_softmax_kernel(%arg0: i32, %arg1: i32, %arg2: memref<8x32xf32, #tpu.memory_space<vmem>>, %arg3: memref<32x128xf32, #tpu.memory_space<vmem>>, %arg4: memref<8x1xi32, #tpu.memory_space<vmem>>, %arg5: memref<8x128xf32, #tpu.memory_space<vmem>>) attributes {dimension_semantics = [#tpu.dimension_semantics<parallel>, #tpu.dimension_semantics<parallel>], iteration_bounds = array<i64: 1, 1>, scalar_prefetch = 0 : i64, scratch_operands = 0 : i64, tpu.core_type = #tpu.core_type<tc>, window_params = [{transform_indices = @transform_0, window_bounds = array<i64: 8, 32>}, {transform_indices = @transform_1, window_bounds = array<i64: 32, 128>}, {transform_indices = @transform_2, window_bounds = array<i64: 8, 1>}, {transform_indices = @transform_3, window_bounds = array<i64: 8, 128>}]} {
    %c0 = arith.constant 0 : index
    %c0_0 = arith.constant 0 : index
    %0 = vector.load %arg2[%c0, %c0_0] : memref<8x32xf32, #tpu.memory_space<vmem>>, vector<8x32xf32>
    %c0_1 = arith.constant 0 : index
    %c0_2 = arith.constant 0 : index
    %1 = vector.load %arg3[%c0_1, %c0_2] : memref<32x128xf32, #tpu.memory_space<vmem>>, vector<32x128xf32>
    %cst = arith.constant dense<0.000000e+00> : vector<8x128xf32>
    %2 = tpu.matmul %0, %1, %cst {dimension_numbers = #tpu.dot_dimension_numbers<[1], [0], [0], [1], [0, 0, 1, 1], [], []>} : vector<8x32xf32>, vector<32x128xf32>, vector<8x128xf32> -> vector<8x128xf32>
    %cst_3 = arith.constant -3.000000e+01 : f32
    %cst_4 = arith.constant 3.000000e+01 : f32
    %3 = vector.broadcast %cst_3 : f32 to vector<8x128xf32>
    %4 = arith.maximumf %3, %2 : vector<8x128xf32>
    %5 = vector.broadcast %cst_4 : f32 to vector<8x128xf32>
    %6 = arith.minimumf %5, %4 : vector<8x128xf32>
    %c0_5 = arith.constant 0 : index
    %c0_6 = arith.constant 0 : index
    %7 = vector.load %arg4[%c0_5, %c0_6] : memref<8x1xi32, #tpu.memory_space<vmem>>, vector<8x1xi32>
    %c128_i32 = arith.constant 128 : i32
    %8 = arith.muli %arg0, %c128_i32 : i32
    %9 = vector.broadcast %8 : i32 to vector<8x1xi32>
    %10 = arith.subi %7, %9 : vector<8x1xi32>
    %11 = tpu.iota {dimensions = array<i32: 1>} : vector<8x128xi32>
    %12 = vector.broadcast %10 : vector<8x1xi32> to vector<8x128xi32>
    %13 = arith.cmpi eq, %11, %12 : vector<8x128xi32>
    %cst_7 = arith.constant 1.050000e+01 : f32
    %cst_8 = arith.constant 0.000000e+00 : f32
    %14 = vector.broadcast %cst_7 : f32 to vector<8x128xf32>
    %15 = vector.broadcast %cst_8 : f32 to vector<8x128xf32>
    %16 = arith.select %13, %14, %15 : vector<8x128xi1>, vector<8x128xf32>
    %17 = arith.subf %6, %16 : vector<8x128xf32>
    %c0_9 = arith.constant 0 : index
    %c0_10 = arith.constant 0 : index
    %18 = vector.load %arg5[%c0_9, %c0_10] : memref<8x128xf32, #tpu.memory_space<vmem>>, vector<8x128xf32>
    tpu.vector_store %arg5[%c0_9, %c0_10], %17 {strides = array<i32>} : memref<8x128xf32, #tpu.memory_space<vmem>>, vector<8x128xf32>,
    return
  }
  func.func @transform_0(%arg0: i32, %arg1: i32) -> (i32, i32) {
    %c0_i32 = arith.constant 0 : i32
    %c0_i32_0 = arith.constant 0 : i32
    return %arg1, %c0_i32 : i32, i32
  }
  func.func @transform_1(%arg0: i32, %arg1: i32) -> (i32, i32) {
    %c0_i32 = arith.constant 0 : i32
    %c0_i32_0 = arith.constant 0 : i32
    return %c0_i32, %arg0 : i32, i32
  }
  func.func @transform_2(%arg0: i32, %arg1: i32) -> (i32, i32) {
    %c0_i32 = arith.constant 0 : i32
    %c0_i32_0 = arith.constant 0 : i32
    return %arg1, %c0_i32 : i32, i32
  }
  func.func @transform_3(%arg0: i32, %arg1: i32) -> (i32, i32) {
    %c0_i32 = arith.constant 0 : i32
    return %arg1, %arg0 : i32, i32
  }
}

</mosaic_0001>

<llo_original>
// kernel: tpu_custom_call.1
$region0: #{tpu_custom_call.1}
  #allocation0 [shape = 'u32[]', space=smem, size = 0x4, offset = 0x4, fixed_abs, tag = 'smem constant byte address 0x4 - core index']
  #allocation1 [shape = 'u32[144,128]{1,0:T(1,128)}', space=vmem, size = 0x12000, scoped, tag = 'internal scratch']
  %s0 = inlined_call_operand.vmem [shape: f32[8,32], index: 0, kind: input, shape index: {}]
  %s1 = inlined_call_operand.hbm [shape: f32[32,128], index: 1, kind: input, shape index: {}]
  %s2 = inlined_call_operand.vmem [shape: s32[8,1], index: 2, kind: input, shape index: {}]
  %s3 = inlined_call_operand.hbm [shape: f32[8,128], index: 3, kind: output, shape index: {}]
  %s4 = sld [smem:[#allocation0]]
  $region26: #{tpu_custom_call.1} parent=0
    _
  %s6 = ssub.s32 1, %s4
  %s7 = scalar_select 0, %s6, %s4
  $region1: #{tpu_custom_call.1} parent=0
    #allocation2 [shape = 'u8[16384]{0}', space=vmem, size = 0x4000, scoped, tag = 'input window, operand 1, single buffered']
    #allocation3 [shape = 's32[1]{0}', space=sflag, size = 0x4, scoped, tag = 'scoped memory for tpu_custom_call.1']
    #allocation4 [shape = 's32[1]{0}', space=sflag, size = 0x4, scoped, tag = 'scoped memory for tpu_custom_call.1']
    #allocation5 [shape = 'u8[4096]{0}', space=vmem, size = 0x1000, scoped, tag = 'output window, operand 0, single buffered']
    %8 = vsyncpa [#allocation3], 0
    %9 = vsyncpa [#allocation4], 0
    // Predicated region
    $region2: #{tpu_custom_call.1} parent=1 // pred_check
      _
    $region3: #{tpu_custom_call.1} parent=1 // pred_check_branch
      %11 = sbr.rel (0) target = $region5
    $region4: #{tpu_custom_call.1} parent=1 // pred_region
      _
    $region5: #{tpu_custom_call.1} parent=1 // pred_fallthru
      _
    // Predicated region
    $region6: #{tpu_custom_call.1} parent=1 // pred_check
      _
    $region7: #{tpu_custom_call.1} parent=1 // pred_check_branch
      %13 = sbr.rel (0) target = $region9
    $region8: #{tpu_custom_call.1} parent=1 // pred_region
      %s15 = ssub.s32 512, 512
      %16 = vsyncadd [#allocation3], %s15
      %s17 = sshll.u32 [#allocation2], 4
      %s18 = int_to_ptr.vmem [resolvable:$true] %s17
      %23 = dma.hbm_to_vmem [thread:$0]  %s1, 512, %s18, [#allocation3], 128, 128, 8
    $region9: #{tpu_custom_call.1} parent=1 // pred_fallthru
      _
    // Predicated region
    $region10: #{tpu_custom_call.1} parent=1 // pred_check
      _
    $region11: #{tpu_custom_call.1} parent=1 // pred_check_branch
      %25 = sbr.rel (0) target = $region13
    $region12: #{tpu_custom_call.1} parent=1 // pred_region
      _
    $region13: #{tpu_custom_call.1} parent=1 // pred_fallthru
      _
    // Predicated region
    $region14: #{tpu_custom_call.1} parent=1 // pred_check
      _
    $region15: #{tpu_custom_call.1} parent=1 // pred_check_branch
      %27 = sbr.rel (0) target = $region17
    $region16: #{tpu_custom_call.1} parent=1 // pred_region
      %28 = dma.done [#allocation3], 512
    $region17: #{tpu_custom_call.1} parent=1 // pred_fallthru
      _
    %v29 = vld [vmem:[%s0] sm:$0xff]
    %v30 = vld [vmem:[#allocation2] sm:$0xff]
    %v31 = vld [vmem:[#allocation2 + $0x8] sm:$0xff]
    %v32 = vld [vmem:[#allocation2 + $0x10] sm:$0xff]
    %v33 = vld [vmem:[#allocation2 + $0x18] sm:$0xff]
    %vm34 = vcmask 261120
    %v36 = vsel %vm34, %v29, 0
    %38 = vmatprep.subr.mxu0 0.0
    %39 = vmatpush1.msra.mxu0 %v30
    %40 = vmatprep.subr.mxu0 0.0
    %41 = vmatpush1.msra.mxu0 %v31
    %42 = vmatprep.subr.mxu0 0.0
    %43 = vmatpush1.msra.mxu0 %v32
    %44 = vmatprep.subr.mxu0 0.0
    %45 = vmatpush1.msra.mxu0 %v33
    %46 = vmatprep.subr.mxu0 0.0
    %47 = vmatpush1.msra.mxu0 0.0
    %48 = vmatprep.subr.mxu0 0.0
    %49 = vmatpush1.msra.mxu0 0.0
    %50 = vmatprep.subr.mxu0 0.0
    %51 = vmatpush1.msra.mxu0 0.0
    %52 = vmatprep.subr.mxu0 0.0
    %53 = vmatpush1.msra.mxu0 0.0
    %54 = vmatprep.subr.mxu0 0.0
    %55 = vmatpush1.msra.mxu0 0.0
    %56 = vmatprep.subr.mxu0 0.0
    %57 = vmatpush1.msra.mxu0 0.0
    %58 = vmatprep.subr.mxu0 0.0
    %59 = vmatpush1.msra.mxu0 0.0
    %60 = vmatprep.subr.mxu0 0.0
    %61 = vmatpush1.msra.mxu0 0.0
    %62 = vmatprep.subr.mxu0 0.0
    %63 = vmatpush1.msra.mxu0 0.0
    %64 = vmatprep.subr.mxu0 0.0
    %65 = vmatpush1.msra.mxu0 0.0
    %66 = vmatprep.subr.mxu0 0.0
    %67 = vmatpush1.msra.mxu0 0.0
    %68 = vmatprep.subr.mxu0 0.0
    %69 = vmatpush1.msra.mxu0 0.0
    %70 = vmatprep.subr.mxu0 0.0
    %71 = vmatpush1.msra.mxu0 0.0
    %72 = vmatprep.subr.mxu0 0.0
    %73 = vmatpush1.msra.mxu0 0.0
    %74 = vmatprep.subr.mxu0 0.0
    %75 = vmatpush1.msra.mxu0 0.0
    %76 = vmatprep.subr.mxu0 0.0
    %77 = vmatpush1.msra.mxu0 0.0
    %78 = vmatprep.subr.mxu0 0.0
    %79 = vmatpush1.msra.mxu0 0.0
    %80 = vmatprep.subr.mxu0 0.0
    %81 = vmatpush1.msra.mxu0 0.0
    %82 = vmatprep.subr.mxu0 0.0
    %83 = vmatpush1.msra.mxu0 0.0
    %84 = vmatprep.subr.mxu0 0.0
    %85 = vmatpush1.msra.mxu0 0.0
    %86 = vmatprep.subr.mxu0 0.0
    %87 = vmatpush1.msra.mxu0 0.0
    %88 = vmatprep.subr.mxu0 0.0
    %89 = vmatpush1.msra.mxu0 0.0
    %90 = vmatprep.subr.mxu0 0.0
    %91 = vmatpush1.msra.mxu0 0.0
    %92 = vmatprep.subr.mxu0 0.0
    %93 = vmatpush1.msra.mxu0 0.0
    %94 = vmatprep.subr.mxu0 0.0
    %95 = vmatpush1.msra.mxu0 0.0
    %96 = vmatprep.subr.mxu0 0.0
    %97 = vmatpush1.msra.mxu0 0.0
    %98 = vmatprep.subr.mxu0 0.0
    %99 = vmatpush1.msra.mxu0 0.0
    %100 = vmatprep.subr.mxu0 0.0
    %101 = vmatpush1.msra.mxu0 0.0
    %102 = vmatprep.mubr.f32.mxu0 0.0
    %103 = vmatmul.mubr.f32.gmra.mrb[0].mxu0 %v36
    %v104 = vpop.f32.mrb[0].mxu0
    %v105 = vadd.f32 0.0, %v104
    %v106 = vpop.f32.mrb[0].mxu0
    %107 = vdwg.mxu0
    %v108 = vmax.f32 %v105, -30.0
    %v109 = vmin.f32 %v108, 30.0
    %v110 = vld [vmem:[%s2] sm:$0xff]
    %s111 = smul.u32 0, 128
    %v112 = vstv %s111
    %v113 = vsub.s32 %v110, %v112
    %v114 = vlaneseq
    %v115 = vand.u32 %v114, 127
    %116 = vset.pattern.permute.xlu0 0
    %117 = vperm.xlu0 %116, %v113
    %v118 = vpop.permute.xlu0 %117
    %vm119 = vcmp.eq.s32.totalorder %v115, %v118
    %v120 = vsel %vm119, 10.5, 0.0
    %v121 = vsub.f32 %v109, %v120
    %122 = vst [vmem:[#allocation5] sm:$0xff] %v121
    // Predicated region
    $region18: #{tpu_custom_call.1} parent=1 // pred_check
      _
    $region19: #{tpu_custom_call.1} parent=1 // pred_check_branch
      %124 = sbr.rel (0) target = $region21
    $region20: #{tpu_custom_call.1} parent=1 // pred_region
      %s126 = ssub.s32 128, 128
      %127 = vsyncadd [#allocation4], %s126
      %s129 = sshll.u32 [#allocation5], 4
      %s130 = int_to_ptr.vmem [resolvable:$true] %s129
      %132 = dma.vmem_to_hbm [thread:$0]  %s130, 128, %s3, [#allocation4]
    $region21: #{tpu_custom_call.1} parent=1 // pred_fallthru
      _
    // Predicated region
    $region22: #{tpu_custom_call.1} parent=1 // pred_check
      _
    $region23: #{tpu_custom_call.1} parent=1 // pred_check_branch
      %134 = sbr.rel (0) target = $region25
    $region24: #{tpu_custom_call.1} parent=1 // pred_region
      %135 = dma.done [#allocation4], 128
    $region25: #{tpu_custom_call.1} parent=1 // pred_fallthru
      _
    %136 = vsyncpa [#allocation3], 1
    %137 = vsyncpa [#allocation4], 1

</llo_original>
